<compile_context>
chip_gen: v7x
topology: tpu7x:2x2x1
jax: 0.10.0
libtpu: 0.0.40
codegen_flags: <defaults>
</compile_context>

<pallas_src>
from functools import partial

import jax
import jax.numpy as jnp
from jax.experimental import pallas as pl
from jax.experimental.pallas import tpu as pltpu


def _round_up(n, m):
    return (n + m - 1) // m * m


def _mlp_kernel(x_ref, *refs):
    """One batch tile of the fused MLP forward.

    refs = (w_0, b_0, ..., w_{n-1}, b_{n-1}, w_out, b_out, out_ref)
      x     : (TILE_B, C) f32   -- cast to compute dtype in-kernel
      w_i   : (in_i, H)   compute dtype (bf16)  -- stored (in, out) = PyTorch W.T
      b_i   : (1, H)      f32
      w_out : (1, H)      compute dtype          -- == nn.Linear(H, 1).weight layout
      b_out : (1, 1)      f32
      out   : (1, TILE_B) f32                    -- lane-dense row of outputs
    """
    out_ref = refs[-1]
    param_refs = refs[:-1]
    n_hidden = (len(param_refs) - 2) // 2
    cdt = param_refs[0].dtype                        # compute dtype (bf16)

    h = x_ref[...].astype(cdt)                       # in-kernel cast (VPU, hidden under MXU)
    for li in range(n_hidden):
        w = param_refs[2 * li][...]                  # (in_i, H) bf16
        b = param_refs[2 * li + 1][...]              # (1, H)    f32
        acc = jnp.dot(h, w, preferred_element_type=jnp.float32)   # MXU, f32 acc
        h32 = jnp.maximum(acc + b, 0.0)              # bias + ReLU in f32 (VPU)
        # TODO(synk): training-mode dropout would go here; eval mode => identity.
        h = h32.astype(cdt)                          # feed next MXU op in bf16

    w_out = param_refs[-2][...]                      # (1, H) bf16
    b_out = param_refs[-1][...]                      # (1, 1) f32
    # Final Linear(H, 1): contract last dims of (1,H) and (TILE_B,H); result is a
    # lane-dense (1, TILE_B) row (flash-attention-style transposed-rhs matmul).
    y = jax.lax.dot_general(
        w_out, h,
        dimension_numbers=(((1,), (1,)), ((), ())),
        preferred_element_type=jnp.float32)          # (1, TILE_B) f32
    out_ref[...] = (y + b_out).astype(out_ref.dtype)


def _pick_tile_b(batch, in_features, hidden_dim, n_hidden, compute_bytes,
                 vmem_budget=14 * 1024 * 1024, max_tile=4096):
    """Pick a batch tile: as big as the VMEM formula allows (cap 4096), then clamp
    so the grid keeps >= ~4 steps when the batch allows (v7x has 2 TensorCores and
    each wants >= 2 pipelined steps; harmless on 1-TC v5e/v6e).  Budget is sized
    against v5e's 16 MiB default scoped VMEM, the tightest default."""
    w_elems = (in_features * hidden_dim
               + (n_hidden - 1) * hidden_dim * hidden_dim
               + hidden_dim)
    # Weights/biases are double-buffered by the default pipeliner even though the
    # index_map is constant; count them twice to stay conservative.
    resident = 2 * (w_elems * compute_bytes + (n_hidden * hidden_dim + 1) * 4)
    avail = max(vmem_budget - resident, 1 << 20)
    # per-row bytes: double-buffered f32 input tile + ~3 live f32 hidden
    # activations + double-buffered f32 output row.
    per_row = 2 * in_features * 4 + 3 * hidden_dim * 4 + 2 * 4
    tb = max(8, min(max_tile, (avail // per_row) // 8 * 8))
    # >= ~4 grid steps when batch allows (only ever shrinks the tile).
    tb = min(tb, max(8, _round_up(pl.cdiv(batch, 4), 8)))
    return int(min(tb, _round_up(batch, 8)))


@partial(jax.jit, static_argnames=("tile_b", "interpret"))
def mlp_forward(x, params, *, tile_b=None, interpret=False):
    """x: (B, in_features) f32 -> (B, 1) f32. Eval-mode MLP forward."""
    ws, bs = params
    n_hidden = len(ws) - 1
    B, Cin = x.shape
    H = ws[0].shape[1]
    cdt = ws[0].dtype

    if tile_b is None:
        tile_b = _pick_tile_b(B, Cin, H, n_hidden, cdt.itemsize)
    TILE_B = min(_round_up(tile_b, 8), _round_up(B, 8))
    B_pad = _round_up(B, TILE_B)
    num_tiles = B_pad // TILE_B

    x_in = x
    if B_pad != B:
        x_in = jnp.pad(x_in, ((0, B_pad - B), (0, 0)))   # padded rows sliced off below

    # Weights/biases: constant index_map -> fetched once, resident in VMEM.
    const = lambda shape: pl.BlockSpec(shape, lambda i: (0,) * len(shape))

    in_specs = [pl.BlockSpec((TILE_B, Cin), lambda i: (i, 0))]
    args = [x_in]
    for li in range(n_hidden + 1):
        in_specs += [const(tuple(ws[li].shape)), const(tuple(bs[li].shape))]
        args += [ws[li], bs[li]]

    # Advisory cost so XLA schedules the producer of x / consumers around the call.
    flops = 2 * B_pad * (Cin * H + (n_hidden - 1) * H * H + H)
    bytes_accessed = (B_pad * Cin * x.dtype.itemsize
                      + sum(int(w.size) * w.dtype.itemsize for w in ws)
                      + sum(int(b.size) * b.dtype.itemsize for b in bs)
                      + B_pad * 4)
    cost = pl.CostEstimate(flops=flops, bytes_accessed=bytes_accessed,
                           transcendentals=0)

    out = pl.pallas_call(
        _mlp_kernel,
        out_shape=jax.ShapeDtypeStruct((num_tiles, 1, TILE_B), jnp.float32),
        grid=(num_tiles,),
        in_specs=in_specs,
        # Squeeze the grid dim; kernel sees a lane-dense (1, TILE_B) row.
        out_specs=pl.BlockSpec((None, 1, TILE_B), lambda i: (i, 0, 0)),
        compiler_params=pltpu.CompilerParams(
            dimension_semantics=("parallel",)),
        cost_estimate=cost,
        interpret=interpret,
    )(*args)
    return out.reshape(-1)[:B].reshape(B, 1)


def init_params(key, in_features, hidden_dim, n_hidden=3,
                compute_dtype=jnp.bfloat16):
    """PyTorch-style uniform init, matching MLP(in_features, 1, hidden_dim, n_hidden).

    Hidden weights stored transposed (in, out); final weight stored (1, H)
    (== nn.Linear(H, 1).weight layout). Weights in `compute_dtype` (bf16),
    biases kept f32 for the f32 epilogue.
    """
    ws, bs = [], []
    fan_in = in_features
    keys = jax.random.split(key, 2 * (n_hidden + 1))
    for li in range(n_hidden):
        s = 1.0 / float(jnp.sqrt(fan_in))
        w = jax.random.uniform(keys[2 * li], (fan_in, hidden_dim), jnp.float32, -s, s)
        b = jax.random.uniform(keys[2 * li + 1], (1, hidden_dim), jnp.float32, -s, s)
        ws.append(w.astype(compute_dtype))
        bs.append(b)
        fan_in = hidden_dim
    s = 1.0 / float(jnp.sqrt(fan_in))
    w = jax.random.uniform(keys[-2], (1, fan_in), jnp.float32, -s, s)
    b = jax.random.uniform(keys[-1], (1, 1), jnp.float32, -s, s)
    ws.append(w.astype(compute_dtype))
    bs.append(b)
    return ws, bs


def reference_forward(x, params):
    """Pure-JAX reference mirroring the kernel's numerics (bf16 MXU, f32 epilogue)."""
    ws, bs = params
    cdt = ws[0].dtype
    h = x.astype(cdt)
    for li in range(len(ws) - 1):
        a = jnp.dot(h, ws[li], preferred_element_type=jnp.float32)
        h = jnp.maximum(a + bs[li], 0.0).astype(cdt)
    y = jnp.dot(h, ws[-1].T, preferred_element_type=jnp.float32) + bs[-1]
    return y


if __name__ == "__main__":
    # Shapes consistent with the module's forward: x is (batch, in_features);
    # MLP(in_features, 1, hidden_dim=128, n_hidden=3), eval mode.
    in_features = 32
    hidden_dim = 128
    n_hidden = 3

    key = jax.random.PRNGKey(0)
    kx, kp = jax.random.split(key)
    params = init_params(kp, in_features, hidden_dim, n_hidden=n_hidden)

    # Case 1: odd batch, explicit small tile -> exercises padding + multi-step grid.
    batch = 37
    x = jax.random.normal(kx, (batch, in_features), jnp.float32)
    out = jax.block_until_ready(mlp_forward(x, params, tile_b=16))
    ref = reference_forward(x, params)
    assert out.shape == (batch, 1), out.shape
    assert jnp.allclose(out, ref, atol=1e-2, rtol=1e-2), (out, ref)

    # Case 2: larger batch, auto tile sizing (>= 4 grid steps, bigger tiles).
    batch2 = 1024
    x2 = jax.random.normal(jax.random.fold_in(kx, 1), (batch2, in_features), jnp.float32)
    out2 = jax.block_until_ready(mlp_forward(x2, params))
    ref2 = reference_forward(x2, params)
    assert out2.shape == (batch2, 1), out2.shape
    assert jnp.allclose(out2, ref2, atol=1e-2, rtol=1e-2)

    print("KERNEL_OK")
</pallas_src>

<mosaic_0001>
module attributes {stable_mosaic.version = 11 : i64} {
  func.func @_mlp_kernel(%arg0: i32, %arg1: memref<16x32xf32, #tpu.memory_space<vmem>>, %arg2: memref<32x128xbf16, #tpu.memory_space<vmem>>, %arg3: memref<1x128xf32, #tpu.memory_space<vmem>>, %arg4: memref<128x128xbf16, #tpu.memory_space<vmem>>, %arg5: memref<1x128xf32, #tpu.memory_space<vmem>>, %arg6: memref<128x128xbf16, #tpu.memory_space<vmem>>, %arg7: memref<1x128xf32, #tpu.memory_space<vmem>>, %arg8: memref<1x128xbf16, #tpu.memory_space<vmem>>, %arg9: memref<1x1xf32, #tpu.memory_space<vmem>>, %arg10: memref<1x1x16xf32, #tpu.memory_space<vmem>>) attributes {dimension_semantics = [#tpu.dimension_semantics<parallel>], iteration_bounds = array<i64: 3>, scalar_prefetch = 0 : i64, scratch_operands = 0 : i64, tpu.core_type = #tpu.core_type<tc>, window_params = [{transform_indices = @transform_0, window_bounds = array<i64: 16, 32>}, {pipeline_mode = #tpu.pipeline_mode<synchronous>, transform_indices = @transform_1, window_bounds = array<i64: 32, 128>}, {pipeline_mode = #tpu.pipeline_mode<synchronous>, transform_indices = @transform_2, window_bounds = array<i64: 1, 128>}, {pipeline_mode = #tpu.pipeline_mode<synchronous>, transform_indices = @transform_3, window_bounds = array<i64: 128, 128>}, {pipeline_mode = #tpu.pipeline_mode<synchronous>, transform_indices = @transform_4, window_bounds = array<i64: 1, 128>}, {pipeline_mode = #tpu.pipeline_mode<synchronous>, transform_indices = @transform_5, window_bounds = array<i64: 128, 128>}, {pipeline_mode = #tpu.pipeline_mode<synchronous>, transform_indices = @transform_6, window_bounds = array<i64: 1, 128>}, {pipeline_mode = #tpu.pipeline_mode<synchronous>, transform_indices = @transform_7, window_bounds = array<i64: 1, 128>}, {pipeline_mode = #tpu.pipeline_mode<synchronous>, transform_indices = @transform_8, window_bounds = array<i64: 1, 1>}, {transform_indices = @transform_9, window_bounds = array<i64: 1, 1, 16>}]} {
    %c0 = arith.constant 0 : index
    %c0_0 = arith.constant 0 : index
    %0 = vector.load %arg1[%c0, %c0_0] : memref<16x32xf32, #tpu.memory_space<vmem>>, vector<16x32xf32>
    %1 = arith.truncf %0 : vector<16x32xf32> to vector<16x32xbf16>
    %c0_1 = arith.constant 0 : index
    %c0_2 = arith.constant 0 : index
    %2 = vector.load %arg2[%c0_1, %c0_2] : memref<32x128xbf16, #tpu.memory_space<vmem>>, vector<32x128xbf16>
    %c0_3 = arith.constant 0 : index
    %c0_4 = arith.constant 0 : index
    %3 = vector.load %arg3[%c0_3, %c0_4] : memref<1x128xf32, #tpu.memory_space<vmem>>, vector<1x128xf32>
    %cst = arith.constant dense<0.000000e+00> : vector<16x128xf32>
    %4 = tpu.matmul %1, %2, %cst {dimension_numbers = #tpu.dot_dimension_numbers<[1], [0], [0], [1], [0, 0, 1, 1], [], []>} : vector<16x32xbf16>, vector<32x128xbf16>, vector<16x128xf32> -> vector<16x128xf32>
    %5 = vector.broadcast %3 : vector<1x128xf32> to vector<16x128xf32>
    %6 = arith.addf %4, %5 : vector<16x128xf32>
    %cst_5 = arith.constant 0.000000e+00 : f32
    %7 = vector.broadcast %cst_5 : f32 to vector<16x128xf32>
    %8 = arith.maximumf %6, %7 : vector<16x128xf32>
    %9 = arith.truncf %8 : vector<16x128xf32> to vector<16x128xbf16>
    %c0_6 = arith.constant 0 : index
    %c0_7 = arith.constant 0 : index
    %10 = vector.load %arg4[%c0_6, %c0_7] : memref<128x128xbf16, #tpu.memory_space<vmem>>, vector<128x128xbf16>
    %c0_8 = arith.constant 0 : index
    %c0_9 = arith.constant 0 : index
    %11 = vector.load %arg5[%c0_8, %c0_9] : memref<1x128xf32, #tpu.memory_space<vmem>>, vector<1x128xf32>
    %cst_10 = arith.constant dense<0.000000e+00> : vector<16x128xf32>
    %12 = tpu.matmul %9, %10, %cst_10 {dimension_numbers = #tpu.dot_dimension_numbers<[1], [0], [0], [1], [0, 0, 1, 1], [], []>} : vector<16x128xbf16>, vector<128x128xbf16>, vector<16x128xf32> -> vector<16x128xf32>
    %13 = vector.broadcast %11 : vector<1x128xf32> to vector<16x128xf32>
    %14 = arith.addf %12, %13 : vector<16x128xf32>
    %cst_11 = arith.constant 0.000000e+00 : f32
    %15 = vector.broadcast %cst_11 : f32 to vector<16x128xf32>
    %16 = arith.maximumf %14, %15 : vector<16x128xf32>
    %17 = arith.truncf %16 : vector<16x128xf32> to vector<16x128xbf16>
    %c0_12 = arith.constant 0 : index
    %c0_13 = arith.constant 0 : index
    %18 = vector.load %arg6[%c0_12, %c0_13] : memref<128x128xbf16, #tpu.memory_space<vmem>>, vector<128x128xbf16>
    %c0_14 = arith.constant 0 : index
    %c0_15 = arith.constant 0 : index
    %19 = vector.load %arg7[%c0_14, %c0_15] : memref<1x128xf32, #tpu.memory_space<vmem>>, vector<1x128xf32>
    %cst_16 = arith.constant dense<0.000000e+00> : vector<16x128xf32>
    %20 = tpu.matmul %17, %18, %cst_16 {dimension_numbers = #tpu.dot_dimension_numbers<[1], [0], [0], [1], [0, 0, 1, 1], [], []>} : vector<16x128xbf16>, vector<128x128xbf16>, vector<16x128xf32> -> vector<16x128xf32>
    %21 = vector.broadcast %19 : vector<1x128xf32> to vector<16x128xf32>
    %22 = arith.addf %20, %21 : vector<16x128xf32>
    %cst_17 = arith.constant 0.000000e+00 : f32
    %23 = vector.broadcast %cst_17 : f32 to vector<16x128xf32>
    %24 = arith.maximumf %22, %23 : vector<16x128xf32>
    %25 = arith.truncf %24 : vector<16x128xf32> to vector<16x128xbf16>
    %c0_18 = arith.constant 0 : index
    %c0_19 = arith.constant 0 : index
    %26 = vector.load %arg8[%c0_18, %c0_19] : memref<1x128xbf16, #tpu.memory_space<vmem>>, vector<1x128xbf16>
    %c0_20 = arith.constant 0 : index
    %c0_21 = arith.constant 0 : index
    %27 = vector.load %arg9[%c0_20, %c0_21] : memref<1x1xf32, #tpu.memory_space<vmem>>, vector<1x1xf32>
    %cst_22 = arith.constant dense<0.000000e+00> : vector<1x16xf32>
    %28 = tpu.matmul %26, %25, %cst_22 {dimension_numbers = #tpu.dot_dimension_numbers<[1], [1], [0], [0], [0, 0, 1, 0], [], []>} : vector<1x128xbf16>, vector<16x128xbf16>, vector<1x16xf32> -> vector<1x16xf32>
    %29 = vector.broadcast %27 : vector<1x1xf32> to vector<1x16xf32>
    %30 = arith.addf %28, %29 : vector<1x16xf32>
    %c0_23 = arith.constant 0 : index
    %c0_24 = arith.constant 0 : index
    %c0_25 = arith.constant 0 : index
    %31 = vector.load %arg10[%c0_23, %c0_24, %c0_25] : memref<1x1x16xf32, #tpu.memory_space<vmem>>, vector<1x1x16xf32>
    %32 = vector.shape_cast %31 : vector<1x1x16xf32> to vector<1x16xf32>
    %33 = vector.shape_cast %30 : vector<1x16xf32> to vector<1x1x16xf32>
    tpu.vector_store %arg10[%c0_23, %c0_24, %c0_25], %33 {strides = array<i32>} : memref<1x1x16xf32, #tpu.memory_space<vmem>>, vector<1x1x16xf32>,
    return
  }
  func.func @transform_0(%arg0: i32) -> (i32, i32) {
    %c0_i32 = arith.constant 0 : i32
    %c0_i32_0 = arith.constant 0 : i32
    return %arg0, %c0_i32 : i32, i32
  }
  func.func @transform_1(%arg0: i32) -> (i32, i32) {
    %c0_i32 = arith.constant 0 : i32
    %c0_i32_0 = arith.constant 0 : i32
    %c0_i32_1 = arith.constant 0 : i32
    return %c0_i32, %c0_i32_0 : i32, i32
  }
  func.func @transform_2(%arg0: i32) -> (i32, i32) {
    %c0_i32 = arith.constant 0 : i32
    %c0_i32_0 = arith.constant 0 : i32
    %c0_i32_1 = arith.constant 0 : i32
    return %c0_i32, %c0_i32_0 : i32, i32
  }
  func.func @transform_3(%arg0: i32) -> (i32, i32) {
    %c0_i32 = arith.constant 0 : i32
    %c0_i32_0 = arith.constant 0 : i32
    %c0_i32_1 = arith.constant 0 : i32
    return %c0_i32, %c0_i32_0 : i32, i32
  }
  func.func @transform_4(%arg0: i32) -> (i32, i32) {
    %c0_i32 = arith.constant 0 : i32
    %c0_i32_0 = arith.constant 0 : i32
    %c0_i32_1 = arith.constant 0 : i32
    return %c0_i32, %c0_i32_0 : i32, i32
  }
  func.func @transform_5(%arg0: i32) -> (i32, i32) {
    %c0_i32 = arith.constant 0 : i32
    %c0_i32_0 = arith.constant 0 : i32
    %c0_i32_1 = arith.constant 0 : i32
    return %c0_i32, %c0_i32_0 : i32, i32
  }
  func.func @transform_6(%arg0: i32) -> (i32, i32) {
    %c0_i32 = arith.constant 0 : i32
    %c0_i32_0 = arith.constant 0 : i32
    %c0_i32_1 = arith.constant 0 : i32
    return %c0_i32, %c0_i32_0 : i32, i32
  }
  func.func @transform_7(%arg0: i32) -> (i32, i32) {
    %c0_i32 = arith.constant 0 : i32
    %c0_i32_0 = arith.constant 0 : i32
    %c0_i32_1 = arith.constant 0 : i32
    return %c0_i32, %c0_i32_0 : i32, i32
  }
  func.func @transform_8(%arg0: i32) -> (i32, i32) {
    %c0_i32 = arith.constant 0 : i32
    %c0_i32_0 = arith.constant 0 : i32
    %c0_i32_1 = arith.constant 0 : i32
    return %c0_i32, %c0_i32_0 : i32, i32
  }
  func.func @transform_9(%arg0: i32) -> (i32, i32, i32) {
    %c0_i32 = arith.constant 0 : i32
    %c0_i32_0 = arith.constant 0 : i32
    %c0_i32_1 = arith.constant 0 : i32
    return %arg0, %c0_i32, %c0_i32_0 : i32, i32, i32
  }
}

</mosaic_0001>

<llo_original>
// kernel: mlp_forward.1
$region0: #{mlp_forward.1}
  #allocation0 [shape = 'u32[]', space=smem, size = 0x4, offset = 0x4, fixed_abs, tag = 'smem constant byte address 0x4 - core index']
  #allocation1 [shape = 'u32[144,128]{1,0:T(1,128)}', space=vmem, size = 0x12000, scoped, tag = 'internal scratch']
  #allocation2 [shape = 'f32[1,1]{1,0:T(1,128)S(1)}', space=vmem, size = 0x200, scoped, tag = 'scoped memory for mlp_forward.1']
  %s0 = inlined_call_operand.vmem [shape: f32[48,32], index: 0, kind: input, shape index: {}]
  %s1 = inlined_call_operand.vmem [shape: bf16[32,128], index: 1, kind: input, shape index: {}]
  %s2 = inlined_call_operand.vmem [shape: f32[1,128], index: 2, kind: input, shape index: {}]
  %s3 = inlined_call_operand.vmem [shape: bf16[128,128], index: 3, kind: input, shape index: {}]
  %s4 = inlined_call_operand.vmem [shape: f32[1,128], index: 4, kind: input, shape index: {}]
  %s5 = inlined_call_operand.vmem [shape: bf16[128,128], index: 5, kind: input, shape index: {}]
  %s6 = inlined_call_operand.vmem [shape: f32[1,128], index: 6, kind: input, shape index: {}]
  %s7 = inlined_call_operand.vmem [shape: bf16[1,128], index: 7, kind: input, shape index: {}]
  %s8 = inlined_call_operand.<no memory space> [shape: f32[1,1], index: 8, kind: input, shape index: {}]
  %s9 = inlined_call_operand.vmem [shape: f32[3,1,16], index: 9, kind: output, shape index: {}]
  %s10 = sld [smem:[#allocation0]]
  $region69: #{mlp_forward.1} parent=0
    _
  %s12 = ssub.s32 1, %s10
  %s13 = scalar_select 0, %s12, %s10
  %v14 = vstv %s8
  %15 = vst [vmem:[#allocation2] sm:$0x1] %v14
  loop: start=0, step=1, limit=5
  $region2: #{mlp_forward.1} parent=0 // loop_pre_header
    _
  $region3: #{mlp_forward.1} parent=0 // loop_header
    %s17 = sphi 0, %s21
    %p18 = scmp.ge.s32.totalorder %s17, 5
    %s27 = sphi 0, %s29
    %s30 = sphi 0, %s27
    %s31 = sphi 0, %s30
    %s47 = sphi 0, %s31
    %s51 = sphi 0, %s51
    %s53 = sphi 0, %s51
    %s54 = sphi 0, %s53
    %s68 = sphi 0, %s54
    %s72 = sphi 0, %s72
    %s74 = sphi 0, %s72
    %s75 = sphi 0, %s74
    %s89 = sphi 0, %s75
    %s93 = sphi 0, %s93
    %s95 = sphi 0, %s93
    %s96 = sphi 0, %s95
    %s110 = sphi 0, %s96
    %s114 = sphi 0, %s114
    %s116 = sphi 0, %s114
    %s117 = sphi 0, %s116
    %s131 = sphi 0, %s117
    %s135 = sphi 0, %s135
    %s137 = sphi 0, %s135
    %s138 = sphi 0, %s137
    %s152 = sphi 0, %s138
    %s156 = sphi 0, %s156
    %s158 = sphi 0, %s156
    %s159 = sphi 0, %s158
    %s173 = sphi 0, %s159
    %s177 = sphi 0, %s177
    %s179 = sphi 0, %s177
    %s180 = sphi 0, %s179
    %s194 = sphi 0, %s180
    %s198 = sphi 0, %s198
    %s200 = sphi 0, %s198
    %s201 = sphi 0, %s200
    %s215 = sphi 0, %s201
    %s221 = sphi 0, %s223
    %s224 = sphi 0, %s221
    %s225 = sphi 0, %s224
    %s241 = sphi 0, %s225
  $region4: #{mlp_forward.1} parent=0 // loop_header_branch
    %20 = sbr.rel (%p18) target = $region8
  $region5: #{mlp_forward.1} parent=0 // loop_body
    %s22 = ssub.s32 %s17, 1
    %s23 = ssub.s32 %s17, 2
    %s24 = sadd.s32 %s17, 1
    %s25 = ssub.s32 %s17, %s24
    %p26 = scmp.eq.s32.totalorder %s25, 0
    %s28 = sadd.s32 %s27, 1
    %s29 = scalar_select %p26, %s27, %s28
    %p32 = pneg %p26
    %p33 = scmp.eq.s32.totalorder %s17, 2
    %p34 = por %p32, %p33
    %p35 = scmp.ne.s32.totalorder %s27, %s30
    %p36 = scmp.eq.s32.totalorder %s17, 0
    %p37 = por %p35, %p36
    %p38 = scmp.ne.s32.totalorder %s27, %s30
    %p39 = scmp.eq.s32.totalorder %s22, 2
    %p40 = por %p38, %p39
    %p41 = scmp.ne.s32.totalorder %s30, %s31
    %p42 = scmp.eq.s32.totalorder %s22, 0
    %p43 = por %p41, %p42
    %p44 = scmp.ne.s32.totalorder %s30, %s31
    %p45 = scmp.eq.s32.totalorder %s23, 2
    %p46 = por %p44, %p45
    %p48 = scmp.ne.s32.totalorder %s31, %s47
    %p49 = scmp.eq.s32.totalorder %s23, 0
    %p50 = por %p48, %p49
    %s52 = sadd.s32 %s51, 1
    %p55 = scmp.eq.s32.totalorder %s17, 2
    %p56 = scmp.ne.s32.totalorder %s51, %s53
    %p57 = scmp.eq.s32.totalorder %s17, 0
    %p58 = por %p56, %p57
    %p59 = scmp.ne.s32.totalorder %s51, %s53
    %p60 = scmp.eq.s32.totalorder %s22, 2
    %p61 = por %p59, %p60
    %p62 = scmp.ne.s32.totalorder %s53, %s54
    %p63 = scmp.eq.s32.totalorder %s22, 0
    %p64 = por %p62, %p63
    %p65 = scmp.ne.s32.totalorder %s53, %s54
    %p66 = scmp.eq.s32.totalorder %s23, 2
    %p67 = por %p65, %p66
    %p69 = scmp.ne.s32.totalorder %s54, %s68
    %p70 = scmp.eq.s32.totalorder %s23, 0
    %p71 = por %p69, %p70
    %s73 = sadd.s32 %s72, 1
    %p76 = scmp.eq.s32.totalorder %s17, 2
    %p77 = scmp.ne.s32.totalorder %s72, %s74
    %p78 = scmp.eq.s32.totalorder %s17, 0
    %p79 = por %p77, %p78
    %p80 = scmp.ne.s32.totalorder %s72, %s74
    %p81 = scmp.eq.s32.totalorder %s22, 2
    %p82 = por %p80, %p81
    %p83 = scmp.ne.s32.totalorder %s74, %s75
    %p84 = scmp.eq.s32.totalorder %s22, 0
    %p85 = por %p83, %p84
    %p86 = scmp.ne.s32.totalorder %s74, %s75
    %p87 = scmp.eq.s32.totalorder %s23, 2
    %p88 = por %p86, %p87
    %p90 = scmp.ne.s32.totalorder %s75, %s89
    %p91 = scmp.eq.s32.totalorder %s23, 0
    %p92 = por %p90, %p91
    %s94 = sadd.s32 %s93, 1
    %p97 = scmp.eq.s32.totalorder %s17, 2
    %p98 = scmp.ne.s32.totalorder %s93, %s95
    %p99 = scmp.eq.s32.totalorder %s17, 0
    %p100 = por %p98, %p99
    %p101 = scmp.ne.s32.totalorder %s93, %s95
    %p102 = scmp.eq.s32.totalorder %s22, 2
    %p103 = por %p101, %p102
    %p104 = scmp.ne.s32.totalorder %s95, %s96
    %p105 = scmp.eq.s32.totalorder %s22, 0
    %p106 = por %p104, %p105
    %p107 = scmp.ne.s32.totalorder %s95, %s96
    %p108 = scmp.eq.s32.totalorder %s23, 2
    %p109 = por %p107, %p108
    %p111 = scmp.ne.s32.totalorder %s96, %s110
    %p112 = scmp.eq.s32.totalorder %s23, 0
    %p113 = por %p111, %p112
    %s115 = sadd.s32 %s114, 1
    %p118 = scmp.eq.s32.totalorder %s17, 2
    %p119 = scmp.ne.s32.totalorder %s114, %s116
    %p120 = scmp.eq.s32.totalorder %s17, 0
    %p121 = por %p119, %p120
    %p122 = scmp.ne.s32.totalorder %s114, %s116
    %p123 = scmp.eq.s32.totalorder %s22, 2
    %p124 = por %p122, %p123
    %p125 = scmp.ne.s32.totalorder %s116, %s117
    %p126 = scmp.eq.s32.totalorder %s22, 0
    %p127 = por %p125, %p126
    %p128 = scmp.ne.s32.totalorder %s116, %s117
    %p129 = scmp.eq.s32.totalorder %s23, 2
    %p130 = por %p128, %p129
    %p132 = scmp.ne.s32.totalorder %s117, %s131
    %p133 = scmp.eq.s32.totalorder %s23, 0
    %p134 = por %p132, %p133
    %s136 = sadd.s32 %s135, 1
    %p139 = scmp.eq.s32.totalorder %s17, 2
    %p140 = scmp.ne.s32.totalorder %s135, %s137
    %p141 = scmp.eq.s32.totalorder %s17, 0
    %p142 = por %p140, %p141
    %p143 = scmp.ne.s32.totalorder %s135, %s137
    %p144 = scmp.eq.s32.totalorder %s22, 2
    %p145 = por %p143, %p144
    %p146 = scmp.ne.s32.totalorder %s137, %s138
    %p147 = scmp.eq.s32.totalorder %s22, 0
    %p148 = por %p146, %p147
    %p149 = scmp.ne.s32.totalorder %s137, %s138
    %p150 = scmp.eq.s32.totalorder %s23, 2
    %p151 = por %p149, %p150
    %p153 = scmp.ne.s32.totalorder %s138, %s152
    %p154 = scmp.eq.s32.totalorder %s23, 0
    %p155 = por %p153, %p154
    %s157 = sadd.s32 %s156, 1
    %p160 = scmp.eq.s32.totalorder %s17, 2
    %p161 = scmp.ne.s32.totalorder %s156, %s158
    %p162 = scmp.eq.s32.totalorder %s17, 0
    %p163 = por %p161, %p162
    %p164 = scmp.ne.s32.totalorder %s156, %s158
    %p165 = scmp.eq.s32.totalorder %s22, 2
    %p166 = por %p164, %p165
    %p167 = scmp.ne.s32.totalorder %s158, %s159
    %p168 = scmp.eq.s32.totalorder %s22, 0
    %p169 = por %p167, %p168
    %p170 = scmp.ne.s32.totalorder %s158, %s159
    %p171 = scmp.eq.s32.totalorder %s23, 2
    %p172 = por %p170, %p171
    %p174 = scmp.ne.s32.totalorder %s159, %s173
    %p175 = scmp.eq.s32.totalorder %s23, 0
    %p176 = por %p174, %p175
    %s178 = sadd.s32 %s177, 1
    %p181 = scmp.eq.s32.totalorder %s17, 2
    %p182 = scmp.ne.s32.totalorder %s177, %s179
    %p183 = scmp.eq.s32.totalorder %s17, 0
    %p184 = por %p182, %p183
    %p185 = scmp.ne.s32.totalorder %s177, %s179
    %p186 = scmp.eq.s32.totalorder %s22, 2
    %p187 = por %p185, %p186
    %p188 = scmp.ne.s32.totalorder %s179, %s180
    %p189 = scmp.eq.s32.totalorder %s22, 0
    %p190 = por %p188, %p189
    %p191 = scmp.ne.s32.totalorder %s179, %s180
    %p192 = scmp.eq.s32.totalorder %s23, 2
    %p193 = por %p191, %p192
    %p195 = scmp.ne.s32.totalorder %s180, %s194
    %p196 = scmp.eq.s32.totalorder %s23, 0
    %p197 = por %p195, %p196
    %s199 = sadd.s32 %s198, 1
    %p202 = scmp.eq.s32.totalorder %s17, 2
    %p203 = scmp.ne.s32.totalorder %s198, %s200
    %p204 = scmp.eq.s32.totalorder %s17, 0
    %p205 = por %p203, %p204
    %p206 = scmp.ne.s32.totalorder %s198, %s200
    %p207 = scmp.eq.s32.totalorder %s22, 2
    %p208 = por %p206, %p207
    %p209 = scmp.ne.s32.totalorder %s200, %s201
    %p210 = scmp.eq.s32.totalorder %s22, 0
    %p211 = por %p209, %p210
    %p212 = scmp.ne.s32.totalorder %s200, %s201
    %p213 = scmp.eq.s32.totalorder %s23, 2
    %p214 = por %p212, %p213
    %p216 = scmp.ne.s32.totalorder %s201, %s215
    %p217 = scmp.eq.s32.totalorder %s23, 0
    %p218 = por %p216, %p217
    %s219 = ssub.s32 %s17, %s24
    %p220 = scmp.eq.s32.totalorder %s219, 0
    %s222 = sadd.s32 %s221, 1
    %s223 = scalar_select %p220, %s221, %s222
    %p226 = pneg %p220
    %p227 = scmp.eq.s32.totalorder %s17, 2
    %p228 = por %p226, %p227
    %p229 = scmp.ne.s32.totalorder %s221, %s224
    %p230 = scmp.eq.s32.totalorder %s17, 0
    %p231 = por %p229, %p230
    %p232 = scmp.ne.s32.totalorder %s221, %s224
    %p233 = scmp.eq.s32.totalorder %s22, 2
    %p234 = por %p232, %p233
    %p235 = scmp.ne.s32.totalorder %s224, %s225
    %p236 = scmp.eq.s32.totalorder %s22, 0
    %p237 = por %p235, %p236
    %p238 = scmp.ne.s32.totalorder %s224, %s225
    %p239 = scmp.eq.s32.totalorder %s23, 2
    %p240 = por %p238, %p239
    %p242 = scmp.ne.s32.totalorder %s225, %s241
    %p243 = scmp.eq.s32.totalorder %s23, 0
    %p244 = por %p242, %p243
    %p245 = scmp.le.s32.totalorder 1, %s17
    %p246 = scmp.lt.s32.totalorder %s17, 4
    %p247 = pnand %p245, %p246
    %p248 = pneg %p247
    // Predicated region
    $region9: #{mlp_forward.1} parent=5 // pred_check
      _
    $region10: #{mlp_forward.1} parent=5 // pred_check_branch
      %250 = sbr.rel (%p247) target = $region12
    $region11: #{mlp_forward.1} parent=5 // pred_region
      %s251 = ssub.s32 %s17, 1
      // Predicated region
      $region13: #{mlp_forward.1} parent=11 // pred_check
        %p252 = pneg %p64
      $region14: #{mlp_forward.1} parent=11 // pred_check_branch
        %254 = sbr.rel (%p252) target = $region16
      $region15: #{mlp_forward.1} parent=11 // pred_region
        _
      $region16: #{mlp_forward.1} parent=11 // pred_fallthru
        _
      // Predicated region
      $region17: #{mlp_forward.1} parent=11 // pred_check
        %p255 = pneg %p85
      $region18: #{mlp_forward.1} parent=11 // pred_check_branch
        %257 = sbr.rel (%p255) target = $region20
      $region19: #{mlp_forward.1} parent=11 // pred_region
        _
      $region20: #{mlp_forward.1} parent=11 // pred_fallthru
        _
      // Predicated region
      $region21: #{mlp_forward.1} parent=11 // pred_check
        %p258 = pneg %p106
      $region22: #{mlp_forward.1} parent=11 // pred_check_branch
        %260 = sbr.rel (%p258) target = $region24
      $region23: #{mlp_forward.1} parent=11 // pred_region
        _
      $region24: #{mlp_forward.1} parent=11 // pred_fallthru
        _
      // Predicated region
      $region25: #{mlp_forward.1} parent=11 // pred_check
        %p261 = pneg %p127
      $region26: #{mlp_forward.1} parent=11 // pred_check_branch
        %263 = sbr.rel (%p261) target = $region28
      $region27: #{mlp_forward.1} parent=11 // pred_region
        _
      $region28: #{mlp_forward.1} parent=11 // pred_fallthru
        _
      // Predicated region
      $region29: #{mlp_forward.1} parent=11 // pred_check
        %p264 = pneg %p148
      $region30: #{mlp_forward.1} parent=11 // pred_check_branch
        %266 = sbr.rel (%p264) target = $region32
      $region31: #{mlp_forward.1} parent=11 // pred_region
        _
      $region32: #{mlp_forward.1} parent=11 // pred_fallthru
        _
      // Predicated region
      $region33: #{mlp_forward.1} parent=11 // pred_check
        %p267 = pneg %p169
      $region34: #{mlp_forward.1} parent=11 // pred_check_branch
        %269 = sbr.rel (%p267) target = $region36
      $region35: #{mlp_forward.1} parent=11 // pred_region
        _
      $region36: #{mlp_forward.1} parent=11 // pred_fallthru
        _
      // Predicated region
      $region37: #{mlp_forward.1} parent=11 // pred_check
        %p270 = pneg %p190
      $region38: #{mlp_forward.1} parent=11 // pred_check_branch
        %272 = sbr.rel (%p270) target = $region40
      $region39: #{mlp_forward.1} parent=11 // pred_region
        _
      $region40: #{mlp_forward.1} parent=11 // pred_fallthru
        _
      // Predicated region
      $region41: #{mlp_forward.1} parent=11 // pred_check
        %p273 = pneg %p211
      $region42: #{mlp_forward.1} parent=11 // pred_check_branch
        %275 = sbr.rel (%p273) target = $region44
      $region43: #{mlp_forward.1} parent=11 // pred_region
        _
      $region44: #{mlp_forward.1} parent=11 // pred_fallthru
        _
    $region12: #{mlp_forward.1} parent=5 // pred_fallthru
      _
    %p276 = scmp.lt.s32.totalorder %s17, 3
    // Predicated region
    $region45: #{mlp_forward.1} parent=5 // pred_check
      %p277 = pneg %p276
    $region46: #{mlp_forward.1} parent=5 // pred_check_branch
      %279 = sbr.rel (%p277) target = $region48
    $region47: #{mlp_forward.1} parent=5 // pred_region
      // Predicated region
      $region49: #{mlp_forward.1} parent=47 // pred_check
        %p280 = pneg %p37
      $region50: #{mlp_forward.1} parent=47 // pred_check_branch
        %282 = sbr.rel (%p280) target = $region52
      $region51: #{mlp_forward.1} parent=47 // pred_region
        %s283 = smul.u32 2, %s17
        %p284 = scmp.lt.s32.totalorder %s283, 5
        %s285 = scalar_select %p284, %s283, 5
        %s286 = smul.addr %s285, 8
        %s287 = scalar_lea.vmem %s0, %s286
        %s288 = smul.u32 2, %s17
      $region52: #{mlp_forward.1} parent=47 // pred_fallthru
        _
    $region48: #{mlp_forward.1} parent=5 // pred_fallthru
      _
    %p289 = scmp.le.s32.totalorder 1, %s17
    %p290 = scmp.lt.s32.totalorder %s17, 4
    %p291 = pnand %p289, %p290
    %p292 = pneg %p291
    // Predicated region
    $region53: #{mlp_forward.1} parent=5 // pred_check
      _
    $region54: #{mlp_forward.1} parent=5 // pred_check_branch
      %294 = sbr.rel (%p291) target = $region56
    $region55: #{mlp_forward.1} parent=5 // pred_region
      %s295 = ssub.s32 %s17, 1
      %s296 = smul.u32 2, %s22
      %p297 = scmp.lt.s32.totalorder %s296, 5
      %s298 = scalar_select %p297, %s296, 5
      %s299 = smul.addr %s298, 8
      %s300 = scalar_lea.vmem %s0, %s299
      %p301 = pneg %p43
      %p302 = pneg %p40
      %p303 = pneg %p64
      %p304 = pneg %p61
      %p305 = pneg %p85
      %p306 = pneg %p82
      %p307 = pneg %p106
      %p308 = pneg %p103
      %p309 = pneg %p127
      %p310 = pneg %p124
      %p311 = pneg %p148
      %p312 = pneg %p145
      %p313 = pneg %p169
      %p314 = pneg %p166
      %p315 = pneg %p190
      %p316 = pneg %p187
      %p317 = pneg %p211
      %p318 = pneg %p208
      %p319 = pneg %p237
      %p320 = pneg %p234
      %p321 = scmp.lt.s32.totalorder %s22, 2
      %s322 = scalar_select %p321, %s22, 2
      %s323 = scalar_lea.vmem %s9, %s322
      %s324 = smul.u32 2, %s22
      %p325 = scmp.lt.s32.totalorder %s324, 5
      %s326 = scalar_select %p325, %s324, 5
      %s327 = smul.addr %s326, 8
      %s328 = scalar_lea.vmem %s0, %s327
      %s329 = smul.u32 2, %s22
      %p330 = scmp.lt.s32.totalorder %s22, 2
      %s331 = scalar_select %p330, %s22, 2
      %s332 = scalar_lea.vmem %s9, %s331
      %v334 = vld [vmem:[%s328] sm:$0xff]
      %v335 = vld [vmem:[%s328 + $0x8] sm:$0xff]
      %v336 = vpack.c.bf16 %v335, %v334
      %v337 = vld [vmem:[%s1] sm:$0xf]
      %v338 = vld [vmem:[%s1 + $0x4] sm:$0xf]
      %v339 = vld [vmem:[%s1 + $0x8] sm:$0xf]
      %v340 = vld [vmem:[%s1 + $0xc] sm:$0xf]
      %v341 = vld [vmem:[%s2] sm:$0x1]
      %v343 = vlaneseq
      %v344 = vshrl.u32 %v343, 7
      %v345 = vsub.s32 0, %v344
      %v346 = vrot.slane %v341, %v345
      %v352 = vunpack.c.l.b16 %v337
      %v353 = vunpack.c.l.b16 %v338
      %v354 = vunpack.c.l.b16 %v339
      %v355 = vunpack.c.l.b16 %v340
      %v356 = vpack.c.b16 %v353, %v352
      %v357 = vpack.c.b16 %v355, %v354
      %vm360 = vcmask 261120
      %v362 = vsel %vm360, %v336, 0
      %364 = vmatprep.subr.bf16.mxu0 0
      %365 = vmatpush1.bf16.msra.mxu0 %v356
      %366 = vmatprep.subr.bf16.mxu0 0
      %367 = vmatpush1.bf16.msra.mxu0 %v357
      %368 = vmatprep.subr.bf16.mxu0 0
      %369 = vmatpush1.bf16.msra.mxu0 0
      %370 = vmatprep.subr.bf16.mxu0 0
      %371 = vmatpush1.bf16.msra.mxu0 0
      %372 = vmatprep.subr.bf16.mxu0 0
      %373 = vmatpush1.bf16.msra.mxu0 0
      %374 = vmatprep.subr.bf16.mxu0 0
      %375 = vmatpush1.bf16.msra.mxu0 0
      %376 = vmatprep.subr.bf16.mxu0 0
      %377 = vmatpush1.bf16.msra.mxu0 0
      %378 = vmatprep.subr.bf16.mxu0 0
      %379 = vmatpush1.bf16.msra.mxu0 0
      %380 = vmatprep.subr.bf16.mxu0 0
      %381 = vmatpush1.bf16.msra.mxu0 0
      %382 = vmatprep.subr.bf16.mxu0 0
      %383 = vmatpush1.bf16.msra.mxu0 0
      %384 = vmatprep.subr.bf16.mxu0 0
      %385 = vmatpush1.bf16.msra.mxu0 0
      %386 = vmatprep.subr.bf16.mxu0 0
      %387 = vmatpush1.bf16.msra.mxu0 0
      %388 = vmatprep.subr.bf16.mxu0 0
      %389 = vmatpush1.bf16.msra.mxu0 0
      %390 = vmatprep.subr.bf16.mxu0 0
      %391 = vmatpush1.bf16.msra.mxu0 0
      %392 = vmatprep.subr.bf16.mxu0 0
      %393 = vmatpush1.bf16.msra.mxu0 0
      %394 = vmatprep.subr.bf16.mxu0 0
      %395 = vmatpush1.bf16.msra.mxu0 0
      %396 = vmatprep.mubr.bf16.mxu0 0
      %397 = vmatmul.mubr.bf16.gmra.mrb[0].mxu0 %v362
      %v398 = vpop.f32.mrb[0].mxu0
      %v399 = vadd.f32 %v346, %v398
      %v400 = vpop.f32.mrb[0].mxu0
      %v401 = vpop.f32.mrb[0].mxu0
      %v402 = vadd.f32 %v346, %v401
      %v403 = vpop.f32.mrb[0].mxu0
      %404 = vdwg.mxu0
      %v405 = vmax.f32 %v399, 0.0
      %v406 = vmax.f32 %v402, 0.0
      %v407 = vpack.c.bf16 %v406, %v405
      %v408 = vld [vmem:[%s3] sm:$0xf]
      %v409 = vld [vmem:[%s3 + $0x4] sm:$0xf]
      %v410 = vld [vmem:[%s3 + $0x8] sm:$0xf]
      %v411 = vld [vmem:[%s3 + $0xc] sm:$0xf]
      %v412 = vld [vmem:[%s3 + $0x10] sm:$0xf]
      %v413 = vld [vmem:[%s3 + $0x14] sm:$0xf]
      %v414 = vld [vmem:[%s3 + $0x18] sm:$0xf]
      %v415 = vld [vmem:[%s3 + $0x1c] sm:$0xf]
      %v416 = vld [vmem:[%s3 + $0x20] sm:$0xf]
      %v417 = vld [vmem:[%s3 + $0x24] sm:$0xf]
      %v418 = vld [vmem:[%s3 + $0x28] sm:$0xf]
      %v419 = vld [vmem:[%s3 + $0x2c] sm:$0xf]
      %v420 = vld [vmem:[%s3 + $0x30] sm:$0xf]
      %v421 = vld [vmem:[%s3 + $0x34] sm:$0xf]
      %v422 = vld [vmem:[%s3 + $0x38] sm:$0xf]
      %v423 = vld [vmem:[%s3 + $0x3c] sm:$0xf]
      %v424 = vld [vmem:[%s4] sm:$0x1]
      %v426 = vlaneseq
      %v427 = vshrl.u32 %v426, 7
      %v428 = vsub.s32 0, %v427
      %v429 = vrot.slane %v424, %v428
      %v447 = vunpack.c.l.b16 %v408
      %v448 = vunpack.c.l.b16 %v409
      %v449 = vunpack.c.l.b16 %v410
      %v450 = vunpack.c.l.b16 %v411
      %v451 = vunpack.c.l.b16 %v412
      %v452 = vunpack.c.l.b16 %v413
      %v453 = vunpack.c.l.b16 %v414
      %v454 = vunpack.c.l.b16 %v415
      %v455 = vunpack.c.l.b16 %v416
      %v456 = vunpack.c.l.b16 %v417
      %v457 = vunpack.c.l.b16 %v418
      %v458 = vunpack.c.l.b16 %v419
      %v459 = vunpack.c.l.b16 %v420
      %v460 = vunpack.c.l.b16 %v421
      %v461 = vunpack.c.l.b16 %v422
      %v462 = vunpack.c.l.b16 %v423
      %v463 = vpack.c.b16 %v448, %v447
      %v464 = vpack.c.b16 %v450, %v449
      %v465 = vpack.c.b16 %v452, %v451
      %v466 = vpack.c.b16 %v454, %v453
      %v467 = vpack.c.b16 %v456, %v455
      %v468 = vpack.c.b16 %v458, %v457
      %v469 = vpack.c.b16 %v460, %v459
      %v470 = vpack.c.b16 %v462, %v461
      %479 = vmatprep.subr.bf16.mxu0 0
      %480 = vmatpush1.bf16.msra.mxu0 %v463
      %481 = vmatprep.subr.bf16.mxu0 0
      %482 = vmatpush1.bf16.msra.mxu0 %v464
      %483 = vmatprep.subr.bf16.mxu0 0
      %484 = vmatpush1.bf16.msra.mxu0 %v465
      %485 = vmatprep.subr.bf16.mxu0 0
      %486 = vmatpush1.bf16.msra.mxu0 %v466
      %487 = vmatprep.subr.bf16.mxu0 0
      %488 = vmatpush1.bf16.msra.mxu0 %v467
      %489 = vmatprep.subr.bf16.mxu0 0
      %490 = vmatpush1.bf16.msra.mxu0 %v468
      %491 = vmatprep.subr.bf16.mxu0 0
      %492 = vmatpush1.bf16.msra.mxu0 %v469
      %493 = vmatprep.subr.bf16.mxu0 0
      %494 = vmatpush1.bf16.msra.mxu0 %v470
      %495 = vmatprep.subr.bf16.mxu0 0
      %496 = vmatpush1.bf16.msra.mxu0 0
      %497 = vmatprep.subr.bf16.mxu0 0
      %498 = vmatpush1.bf16.msra.mxu0 0
      %499 = vmatprep.subr.bf16.mxu0 0
      %500 = vmatpush1.bf16.msra.mxu0 0
      %501 = vmatprep.subr.bf16.mxu0 0
      %502 = vmatpush1.bf16.msra.mxu0 0
      %503 = vmatprep.subr.bf16.mxu0 0
      %504 = vmatpush1.bf16.msra.mxu0 0
      %505 = vmatprep.subr.bf16.mxu0 0
      %506 = vmatpush1.bf16.msra.mxu0 0
      %507 = vmatprep.subr.bf16.mxu0 0
      %508 = vmatpush1.bf16.msra.mxu0 0
      %509 = vmatprep.subr.bf16.mxu0 0
      %510 = vmatpush1.bf16.msra.mxu0 0
      %511 = vmatprep.mubr.bf16.mxu0 0
      %512 = vmatmul.mubr.bf16.gmra.mrb[0].mxu0 %v407
      %v513 = vpop.f32.mrb[0].mxu0
      %v514 = vadd.f32 %v429, %v513
      %v515 = vpop.f32.mrb[0].mxu0
      %v516 = vpop.f32.mrb[0].mxu0
      %v517 = vadd.f32 %v429, %v516
      %v518 = vpop.f32.mrb[0].mxu0
      %519 = vdwg.mxu0
      %v520 = vmax.f32 %v514, 0.0
      %v521 = vmax.f32 %v517, 0.0
      %v522 = vpack.c.bf16 %v521, %v520
      %v523 = vld [vmem:[%s5] sm:$0xf]
      %v524 = vld [vmem:[%s5 + $0x4] sm:$0xf]
      %v525 = vld [vmem:[%s5 + $0x8] sm:$0xf]
      %v526 = vld [vmem:[%s5 + $0xc] sm:$0xf]
      %v527 = vld [vmem:[%s5 + $0x10] sm:$0xf]
      %v528 = vld [vmem:[%s5 + $0x14] sm:$0xf]
      %v529 = vld [vmem:[%s5 + $0x18] sm:$0xf]
      %v530 = vld [vmem:[%s5 + $0x1c] sm:$0xf]
      %v531 = vld [vmem:[%s5 + $0x20] sm:$0xf]
      %v532 = vld [vmem:[%s5 + $0x24] sm:$0xf]
      %v533 = vld [vmem:[%s5 + $0x28] sm:$0xf]
      %v534 = vld [vmem:[%s5 + $0x2c] sm:$0xf]
      %v535 = vld [vmem:[%s5 + $0x30] sm:$0xf]
      %v536 = vld [vmem:[%s5 + $0x34] sm:$0xf]
      %v537 = vld [vmem:[%s5 + $0x38] sm:$0xf]
      %v538 = vld [vmem:[%s5 + $0x3c] sm:$0xf]
      %v539 = vld [vmem:[%s6] sm:$0x1]
      %v541 = vlaneseq
      %v542 = vshrl.u32 %v541, 7
      %v543 = vsub.s32 0, %v542
      %v544 = vrot.slane %v539, %v543
      %v562 = vunpack.c.l.b16 %v523
      %v563 = vunpack.c.l.b16 %v524
      %v564 = vunpack.c.l.b16 %v525
      %v565 = vunpack.c.l.b16 %v526
      %v566 = vunpack.c.l.b16 %v527
      %v567 = vunpack.c.l.b16 %v528
      %v568 = vunpack.c.l.b16 %v529
      %v569 = vunpack.c.l.b16 %v530
      %v570 = vunpack.c.l.b16 %v531
      %v571 = vunpack.c.l.b16 %v532
      %v572 = vunpack.c.l.b16 %v533
      %v573 = vunpack.c.l.b16 %v534
      %v574 = vunpack.c.l.b16 %v535
      %v575 = vunpack.c.l.b16 %v536
      %v576 = vunpack.c.l.b16 %v537
      %v577 = vunpack.c.l.b16 %v538
      %v578 = vpack.c.b16 %v563, %v562
      %v579 = vpack.c.b16 %v565, %v564
      %v580 = vpack.c.b16 %v567, %v566
      %v581 = vpack.c.b16 %v569, %v568
      %v582 = vpack.c.b16 %v571, %v570
      %v583 = vpack.c.b16 %v573, %v572
      %v584 = vpack.c.b16 %v575, %v574
      %v585 = vpack.c.b16 %v577, %v576
      %594 = vmatprep.subr.bf16.mxu0 0
      %595 = vmatpush1.bf16.msra.mxu0 %v578
      %596 = vmatprep.subr.bf16.mxu0 0
      %597 = vmatpush1.bf16.msra.mxu0 %v579
      %598 = vmatprep.subr.bf16.mxu0 0
      %599 = vmatpush1.bf16.msra.mxu0 %v580
      %600 = vmatprep.subr.bf16.mxu0 0
      %601 = vmatpush1.bf16.msra.mxu0 %v581
      %602 = vmatprep.subr.bf16.mxu0 0
      %603 = vmatpush1.bf16.msra.mxu0 %v582
      %604 = vmatprep.subr.bf16.mxu0 0
      %605 = vmatpush1.bf16.msra.mxu0 %v583
      %606 = vmatprep.subr.bf16.mxu0 0
      %607 = vmatpush1.bf16.msra.mxu0 %v584
      %608 = vmatprep.subr.bf16.mxu0 0
      %609 = vmatpush1.bf16.msra.mxu0 %v585
      %610 = vmatprep.subr.bf16.mxu0 0
      %611 = vmatpush1.bf16.msra.mxu0 0
      %612 = vmatprep.subr.bf16.mxu0 0
      %613 = vmatpush1.bf16.msra.mxu0 0
      %614 = vmatprep.subr.bf16.mxu0 0
      %615 = vmatpush1.bf16.msra.mxu0 0
      %616 = vmatprep.subr.bf16.mxu0 0
      %617 = vmatpush1.bf16.msra.mxu0 0
      %618 = vmatprep.subr.bf16.mxu0 0
      %619 = vmatpush1.bf16.msra.mxu0 0
      %620 = vmatprep.subr.bf16.mxu0 0
      %621 = vmatpush1.bf16.msra.mxu0 0
      %622 = vmatprep.subr.bf16.mxu0 0
      %623 = vmatpush1.bf16.msra.mxu0 0
      %624 = vmatprep.subr.bf16.mxu0 0
      %625 = vmatpush1.bf16.msra.mxu0 0
      %626 = vmatprep.mubr.bf16.mxu0 0
      %627 = vmatmul.mubr.bf16.gmra.mrb[0].mxu0 %v522
      %v628 = vpop.f32.mrb[0].mxu0
      %v629 = vadd.f32 %v544, %v628
      %v630 = vpop.f32.mrb[0].mxu0
      %v631 = vpop.f32.mrb[0].mxu0
      %v632 = vadd.f32 %v544, %v631
      %v633 = vpop.f32.mrb[0].mxu0
      %634 = vdwg.mxu0
      %v635 = vmax.f32 %v629, 0.0
      %v636 = vmax.f32 %v632, 0.0
      %v637 = vpack.c.bf16 %v636, %v635
      %v638 = vld [vmem:[%s7] sm:$0x1]
      %v639 = vld [vmem:[#allocation2] sm:$0x1]
      %641 = vset.pattern.permute.xlu0 0
      %642 = vperm.xlu0 %641, %v639
      %v643 = vpop.permute.xlu0 %642
      %v645 = vlaneseq
      %v646 = vshrl.u32 %v645, 7
      %v647 = vsub.s32 0, %v646
      %v648 = vrot.slane %v643, %v647
      %649 = vmatprep.subr.bf16.mxu0 0
      %650 = vmatpush1.bf16.xpose.msra.mxu0 %v637
      %651 = vmatprep.subr.bf16.mxu0 0
      %652 = vmatpush1.bf16.xpose.msra.mxu0 0
      %653 = vmatprep.subr.bf16.mxu0 0
      %654 = vmatpush1.bf16.xpose.msra.mxu0 0
      %655 = vmatprep.subr.bf16.mxu0 0
      %656 = vmatpush1.bf16.xpose.msra.mxu0 0
      %657 = vmatprep.subr.bf16.mxu0 0
      %658 = vmatpush1.bf16.xpose.msra.mxu0 0
      %659 = vmatprep.subr.bf16.mxu0 0
      %660 = vmatpush1.bf16.xpose.msra.mxu0 0
      %661 = vmatprep.subr.bf16.mxu0 0
      %662 = vmatpush1.bf16.xpose.msra.mxu0 0
      %663 = vmatprep.subr.bf16.mxu0 0
      %664 = vmatpush1.bf16.xpose.msra.mxu0 0
      %665 = vmatprep.subr.bf16.mxu0 0
      %666 = vmatpush1.bf16.xpose.msra.mxu0 0
      %667 = vmatprep.subr.bf16.mxu0 0
      %668 = vmatpush1.bf16.xpose.msra.mxu0 0
      %669 = vmatprep.subr.bf16.mxu0 0
      %670 = vmatpush1.bf16.xpose.msra.mxu0 0
      %671 = vmatprep.subr.bf16.mxu0 0
      %672 = vmatpush1.bf16.xpose.msra.mxu0 0
      %673 = vmatprep.subr.bf16.mxu0 0
      %674 = vmatpush1.bf16.xpose.msra.mxu0 0
      %675 = vmatprep.subr.bf16.mxu0 0
      %676 = vmatpush1.bf16.xpose.msra.mxu0 0
      %677 = vmatprep.subr.bf16.mxu0 0
      %678 = vmatpush1.bf16.xpose.msra.mxu0 0
      %679 = vmatprep.subr.bf16.mxu0 0
      %680 = vmatpush1.bf16.xpose.msra.mxu0 0
      %681 = vmatprep.mubr.bf16.mxu0 0
      %682 = vmatmul.mubr.bf16.gmra.mrb[0].mxu0 %v638
      %v683 = vpop.f32.mrb[0].mxu0
      %v684 = vadd.f32 %v648, %v683
      %v685 = vpop.f32.mrb[0].mxu0
      %v686 = vpop.f32.mrb[0].mxu0
      %v687 = vpop.f32.mrb[0].mxu0
      %688 = vdwg.mxu0
      %vm689 = vcmask 122880
      %690 = vst.msk [vmem:[%s332] sm:$0x1] %vm689, %v684
      %p691 = scmp.lt.s32.totalorder %s22, 2
      %s692 = scalar_select %p691, %s22, 2
      %s693 = scalar_lea.vmem %s9, %s692
      // Predicated region
      $region57: #{mlp_forward.1} parent=55 // pred_check
        %p694 = pneg %p234
      $region58: #{mlp_forward.1} parent=55 // pred_check_branch
        %696 = sbr.rel (%p694) target = $region60
      $region59: #{mlp_forward.1} parent=55 // pred_region
        _
      $region60: #{mlp_forward.1} parent=55 // pred_fallthru
        _
    $region56: #{mlp_forward.1} parent=5 // pred_fallthru
      _
    %p697 = scmp.le.s32.totalorder 2, %s17
    // Predicated region
    $region61: #{mlp_forward.1} parent=5 // pred_check
      %p698 = pneg %p697
    $region62: #{mlp_forward.1} parent=5 // pred_check_branch
      %700 = sbr.rel (%p698) target = $region64
    $region63: #{mlp_forward.1} parent=5 // pred_region
      %s701 = ssub.s32 %s17, 2
      // Predicated region
      $region65: #{mlp_forward.1} parent=63 // pred_check
        %p702 = pneg %p240
      $region66: #{mlp_forward.1} parent=63 // pred_check_branch
        %704 = sbr.rel (%p702) target = $region68
      $region67: #{mlp_forward.1} parent=63 // pred_region
        %p705 = scmp.lt.s32.totalorder %s23, 2
        %s706 = scalar_select %p705, %s23, 2
        %s707 = scalar_lea.vmem %s9, %s706
      $region68: #{mlp_forward.1} parent=63 // pred_fallthru
        _
    $region64: #{mlp_forward.1} parent=5 // pred_fallthru
      _
  $region6: #{mlp_forward.1} parent=0 // loop_footer
    %s21 = sadd.s32 1, %s17
  $region7: #{mlp_forward.1} parent=0 // loop_footer_branch
    %16 = sbr.rel target = $region3
  $region8: #{mlp_forward.1} parent=0 // loop_exit
    _

</llo_original>
